<compile_context>
chip_gen: v5e
topology: v5e:2x2
jax: 0.10.0
libtpu: 0.0.40
codegen_flags: <defaults>
</compile_context>

<pallas_src>
import functools

import jax
import jax.numpy as jnp
from jax.experimental import pallas as pl
from jax.experimental.pallas import tpu as pltpu


_M_BYTES_CAP = 4 << 20          # cap for the (double-buffered) selection matrix
_BLOCK_VMEM_BUDGET = 24 << 20   # budget for double-buffered x/out blocks
_VMEM_LIMIT = 40 << 20          # scoped VMEM limit passed to the compiler


def _round_up(a, m):
    return -(-a // m) * m


def _round_down(a, m):
    return (a // m) * m


def _is_v5e():
    try:
        kind = jax.devices()[0].device_kind.lower()
    except Exception:
        return False
    return ("v5 lite" in kind) or ("v5lite" in kind) or ("v5e" in kind)


def _upsample_flat_kernel(x_ref, m_ref, o_ref, *, precision):
    # x_ref: (bt, R*hw), m_ref: (R*hw, R*HW), o_ref: (bt, R*HW)
    y = jnp.dot(
        x_ref[...],
        m_ref[...],
        preferred_element_type=jnp.float32,
        precision=precision,
    )
    o_ref[...] = y.astype(o_ref.dtype)


def _selection_matrix(h, w, sh, sw, dtype):
    """M[(i*w + j), (I*W + J)] = 1 iff (I//sh, J//sw) == (i, j)."""
    H, W = h * sh, w * sw
    row_src = (jnp.arange(H, dtype=jnp.int32) // sh)[:, None]    # (H, 1) -> i
    col_src = (jnp.arange(W, dtype=jnp.int32) // sw)[None, :]    # (1, W) -> j
    src_idx = (row_src * w + col_src).reshape(-1)                 # (H*W,)
    in_idx = jnp.arange(h * w, dtype=jnp.int32)[:, None]          # (h*w, 1)
    return (in_idx == src_idx[None, :]).astype(dtype)             # (h*w, H*W)


def reshape2d_forward(x, img_dim, y_logvar_dim, *, block_rows=None, packing=None):
    """Equivalent of reshape2D.forward: Upsample(x.view(-1, 1, h, w))."""
    h, w = int(y_logvar_dim[0]), int(y_logvar_dim[1])
    assert int(img_dim[1]) % h == 0 and int(img_dim[2]) % w == 0, (
        "img_dim spatial dims must be integer multiples of y_logvar_dim")
    sh = int(img_dim[1]) // h
    sw = int(img_dim[2]) // w
    H, W = h * sh, w * sw
    hw, HW = h * w, H * W

    assert x.size % hw == 0, "x.numel() must be divisible by h*w for the view"
    x2 = jnp.reshape(x, (-1, hw))          # the torch .view(-1, 1, h, w), flattened
    B = x2.shape[0]
    dtype = x2.dtype
    itemsize = jnp.dtype(dtype).itemsize
    # Sublane alignment for row blocks (bf16/f16 pack 16 rows per vreg).
    sub = 16 if itemsize == 2 else 8

    # ---- choose the K-packing factor R (block-diagonal contraction packing) ----
    if packing is None:
        target_k = 128 if _is_v5e() else 256      # MXU contraction depth
        r = max(1, target_k // hw)
        # Shrink if the VMEM-resident (double-buffered) block-diag M gets big.
        while r > 1 and 2 * (r * hw) * (r * HW) * itemsize > _M_BYTES_CAP:
            r -= 1
        # Avoid a padding pass over HBM: take the largest divisor of B.
        while r > 1 and B % r != 0:
            r -= 1
        R = r
    else:
        R = int(packing)
        assert R >= 1 and B % R == 0, "packing must divide the batch"
    K, N = R * hw, R * HW
    Bp = B // R
    xp = jnp.reshape(x2, (Bp, K))          # pure view: R consecutive rows per packed row

    # Scale guard on the VMEM-resident selection matrix.
    assert 2 * K * N * itemsize <= (8 << 20), (
        "selection matrix too large for the VMEM-resident design; "
        "TODO(synk): tile H*W with a second grid dimension")

    # ---- block_rows (packed rows per grid step): VMEM budget + >=2-4 grid steps ----
    if block_rows is None:
        bt_vmem = _BLOCK_VMEM_BUDGET // (2 * (K + N) * itemsize)
        bt_vmem = max(sub, _round_down(int(bt_vmem), sub))
        bt_split = _round_up(pl.cdiv(Bp, 4), sub)   # aim for >=4 parallel steps
        bt = min(bt_vmem, bt_split)
        if bt >= Bp:
            bt = Bp                                  # single full-extent block
    else:
        bt = int(block_rows)
        # (8,128) rule: second-to-last block dim multiple of sublane or full dim.
        assert bt == Bp or bt % sub == 0, (
            "block_rows must be a multiple of %d (or == packed batch)" % sub)

    grid = (pl.cdiv(Bp, bt),)

    # Exactness: 0/1 selection matmul. f32 forces full-precision MXU passes;
    # bf16 stays on the native (already exact) bf16 path.
    precision = jax.lax.Precision.HIGHEST if dtype == jnp.float32 else None
    M = _selection_matrix(h, w, sh, sw, dtype)
    if R > 1:
        M = jnp.kron(jnp.eye(R, dtype=dtype), M)     # block-diagonal (K, N)

    out = pl.pallas_call(
        functools.partial(_upsample_flat_kernel, precision=precision),
        out_shape=jax.ShapeDtypeStruct((Bp, N), x.dtype),
        grid_spec=pltpu.PrefetchScalarGridSpec(
            num_scalar_prefetch=0,
            grid=grid,
            in_specs=[
                pl.BlockSpec((bt, K), lambda b: (b, 0)),
                # Constant block index -> DMA'd once, VMEM-resident across grid.
                pl.BlockSpec((K, N), lambda b: (0, 0)),
            ],
            out_specs=pl.BlockSpec((bt, N), lambda b: (b, 0)),
        ),
        compiler_params=pltpu.CompilerParams(
            dimension_semantics=("parallel",),
            vmem_limit_bytes=_VMEM_LIMIT),
    )(xp, M)

    # (Bp, R*HW) is row-major identical to (B, HW) because M is block-diagonal.
    return jnp.reshape(out, (B, 1, H, W))


def _reference_forward(x, img_dim, y_logvar_dim):
    """Pure-JAX reference of the same forward pass (for verification)."""
    h, w = int(y_logvar_dim[0]), int(y_logvar_dim[1])
    sh = int(img_dim[1]) // h
    sw = int(img_dim[2]) // w
    x4 = jnp.reshape(x, (-1, 1, h, w))
    y = jnp.repeat(x4, sh, axis=2)
    y = jnp.repeat(y, sw, axis=3)
    return y


if __name__ == "__main__":
    # Module configuration (reshape2D has no learned parameters).
    img_dim = (1, 16, 16)      # (C, H, W) of the target image
    y_logvar_dim = (8, 8)      # (h, w) of the low-res logvar map -> scale (2, 2)

    key = jax.random.PRNGKey(0)
    k1, k2, k3 = jax.random.split(key, 3)

    # Case 1: tiny batch, f32 -> packing falls back to R=2 (largest divisor of B),
    # single full-extent block.
    x1 = jax.random.normal(k1, (2, 64), dtype=jnp.float32)
    out1 = jax.block_until_ready(reshape2d_forward(x1, img_dim, y_logvar_dim))
    ref1 = _reference_forward(x1, img_dim, y_logvar_dim)
    assert out1.shape == (2, 1, 16, 16), out1.shape
    assert jnp.array_equal(out1, ref1), "f32 mismatch vs reference upsample"

    # Case 2: f32, R=4 packing, default auto block_rows -> multi-step grid with a
    # partial last block (Bp=10 packed rows, 8-row blocks).
    x2 = jax.random.normal(k2, (40, 64), dtype=jnp.float32)
    out2 = jax.block_until_ready(reshape2d_forward(x2, img_dim, y_logvar_dim))
    ref2 = _reference_forward(x2, img_dim, y_logvar_dim)
    assert out2.shape == (40, 1, 16, 16), out2.shape
    assert jnp.array_equal(out2, ref2), "partial-block mismatch vs reference"

    # Case 3: bf16 input stays on the native bf16 MXU path and is still exact.
    x3 = jax.random.normal(k3, (8, 64), dtype=jnp.bfloat16)
    out3 = jax.block_until_ready(reshape2d_forward(x3, img_dim, y_logvar_dim))
    ref3 = _reference_forward(x3, img_dim, y_logvar_dim)
    assert out3.shape == (8, 1, 16, 16), out3.shape
    assert jnp.array_equal(out3, ref3), "bf16 mismatch vs reference upsample"

    print("KERNEL_OK")
</pallas_src>

<mosaic_0001>
module attributes {stable_mosaic.version = 11 : i64} {
  func.func @_upsample_flat_kernel(%arg0: i32, %arg1: memref<1x128xf32, #tpu.memory_space<vmem>>, %arg2: memref<128x512xf32, #tpu.memory_space<vmem>>, %arg3: memref<1x512xf32, #tpu.memory_space<vmem>>) attributes {dimension_semantics = [#tpu.dimension_semantics<parallel>], iteration_bounds = array<i64: 1>, scalar_prefetch = 0 : i64, scratch_operands = 0 : i64, tpu.core_type = #tpu.core_type<tc>, window_params = [{transform_indices = @transform_0, window_bounds = array<i64: 1, 128>}, {pipeline_mode = #tpu.pipeline_mode<synchronous>, transform_indices = @transform_1, window_bounds = array<i64: 128, 512>}, {transform_indices = @transform_2, window_bounds = array<i64: 1, 512>}]} {
    %c0 = arith.constant 0 : index
    %c0_0 = arith.constant 0 : index
    %0 = vector.load %arg1[%c0, %c0_0] : memref<1x128xf32, #tpu.memory_space<vmem>>, vector<1x128xf32>
    %c0_1 = arith.constant 0 : index
    %c0_2 = arith.constant 0 : index
    %1 = vector.load %arg2[%c0_1, %c0_2] : memref<128x512xf32, #tpu.memory_space<vmem>>, vector<128x512xf32>
    %cst = arith.constant dense<0.000000e+00> : vector<1x512xf32>
    %2 = tpu.matmul %0, %1, %cst {dimension_numbers = #tpu.dot_dimension_numbers<[1], [0], [0], [1], [0, 0, 1, 1], [], []>, precision = #tpu.contract_precision<fp32>} : vector<1x128xf32>, vector<128x512xf32>, vector<1x512xf32> -> vector<1x512xf32>
    %c0_3 = arith.constant 0 : index
    %c0_4 = arith.constant 0 : index
    %3 = vector.load %arg3[%c0_3, %c0_4] : memref<1x512xf32, #tpu.memory_space<vmem>>, vector<1x512xf32>
    tpu.vector_store %arg3[%c0_3, %c0_4], %2 {strides = array<i32>} : memref<1x512xf32, #tpu.memory_space<vmem>>, vector<1x512xf32>,
    return
  }
  func.func @transform_0(%arg0: i32) -> (i32, i32) {
    %c0_i32 = arith.constant 0 : i32
    %c0_i32_0 = arith.constant 0 : i32
    return %arg0, %c0_i32 : i32, i32
  }
  func.func @transform_1(%arg0: i32) -> (i32, i32) {
    %c0_i32 = arith.constant 0 : i32
    %c0_i32_0 = arith.constant 0 : i32
    %c0_i32_1 = arith.constant 0 : i32
    return %c0_i32, %c0_i32_0 : i32, i32
  }
  func.func @transform_2(%arg0: i32) -> (i32, i32) {
    %c0_i32 = arith.constant 0 : i32
    %c0_i32_0 = arith.constant 0 : i32
    return %arg0, %c0_i32 : i32, i32
  }
}

</mosaic_0001>

<llo_original>
// kernel: tpu_custom_call.1
$region0: #{tpu_custom_call.1}
  #allocation0 [shape = 'u32[]', space=smem, size = 0x4, offset = 0x4, fixed_abs, tag = 'smem constant byte address 0x4 - core index']
  #allocation1 [shape = 'u32[72,128]{1,0:T(1,128)}', space=vmem, size = 0x9000, scoped, tag = 'internal scratch']
  %s0 = inlined_call_operand.hbm [shape: f32[1,128], index: 0, kind: input, shape index: {}]
  %s1 = inlined_call_operand.hbm [shape: f32[128,512], index: 1, kind: input, shape index: {}]
  %s2 = inlined_call_operand.hbm [shape: f32[1,512], index: 2, kind: output, shape index: {}]
  %s3 = sld [smem:[#allocation0]]
  $region26: #{tpu_custom_call.1} parent=0
    _
  %s5 = ssub.s32 1, %s3
  %s6 = scalar_select 0, %s5, %s3
  $region1: #{tpu_custom_call.1} parent=0
    #allocation2 [shape = 'u8[512]{0}', space=vmem, size = 0x400, scoped, tag = 'input window, operand 0, single buffered']
    #allocation3 [shape = 's32[1]{0}', space=sflag, size = 0x4, scoped, tag = 'scoped memory for tpu_custom_call.1']
    #allocation4 [shape = 's32[1]{0}', space=sflag, size = 0x4, scoped, tag = 'scoped memory for tpu_custom_call.1']
    #allocation5 [shape = 'u8[262144]{0}', space=vmem, size = 0x40000, scoped, tag = 'input window, operand 1, single buffered']
    #allocation6 [shape = 's32[1]{0}', space=sflag, size = 0x4, scoped, tag = 'scoped memory for tpu_custom_call.1']
    #allocation7 [shape = 'u8[2048]{0}', space=vmem, size = 0x800, scoped, tag = 'output window, operand 0, single buffered']
    %7 = vsyncpa [#allocation3], 0
    %8 = vsyncpa [#allocation6], 0
    %9 = vsyncpa [#allocation4], 0
    // Predicated region
    $region2: #{tpu_custom_call.1} parent=1 // pred_check
      _
    $region3: #{tpu_custom_call.1} parent=1 // pred_check_branch
      %11 = sbr.rel (0) target = $region5
    $region4: #{tpu_custom_call.1} parent=1 // pred_region
      %13 = vsyncadd [#allocation3], 0
      %s15 = sshll.u32 %s0, 4
      %s16 = int_to_ptr.hbm [resolvable:$true] %s15
      %s17 = sshll.u32 [#allocation2], 4
      %s18 = int_to_ptr.vmem [resolvable:$true] %s17
      %20 = dma.hbm_to_vmem [thread:$0]  %s16, 16, %s18, [#allocation3]
    $region5: #{tpu_custom_call.1} parent=1 // pred_fallthru
      _
    // Predicated region
    $region6: #{tpu_custom_call.1} parent=1 // pred_check
      _
    $region7: #{tpu_custom_call.1} parent=1 // pred_check_branch
      %22 = sbr.rel (0) target = $region9
    $region8: #{tpu_custom_call.1} parent=1 // pred_region
      %24 = vsyncadd [#allocation6], 0
      %s25 = sshll.u32 %s1, 4
      %s26 = int_to_ptr.hbm [resolvable:$true] %s25
      %s27 = sshll.u32 [#allocation5], 4
      %s28 = int_to_ptr.vmem [resolvable:$true] %s27
      %33 = dma.hbm_to_vmem [thread:$0]  %s26, 8192, %s28, [#allocation6], 512, 512, 32
    $region9: #{tpu_custom_call.1} parent=1 // pred_fallthru
      _
    // Predicated region
    $region10: #{tpu_custom_call.1} parent=1 // pred_check
      _
    $region11: #{tpu_custom_call.1} parent=1 // pred_check_branch
      %35 = sbr.rel (0) target = $region13
    $region12: #{tpu_custom_call.1} parent=1 // pred_region
      %37 = dma.done [#allocation3], 16
    $region13: #{tpu_custom_call.1} parent=1 // pred_fallthru
      _
    // Predicated region
    $region14: #{tpu_custom_call.1} parent=1 // pred_check
      _
    $region15: #{tpu_custom_call.1} parent=1 // pred_check_branch
      %39 = sbr.rel (0) target = $region17
    $region16: #{tpu_custom_call.1} parent=1 // pred_region
      %41 = dma.done [#allocation6], 8192
    $region17: #{tpu_custom_call.1} parent=1 // pred_fallthru
      _
    %v42 = vld [vmem:[#allocation2] sm:$0x1]
    %v43 = vld [vmem:[#allocation5] sm:$0xff]
    %v44 = vld [vmem:[#allocation5 + $0x8] sm:$0xff]
    %v45 = vld [vmem:[#allocation5 + $0x10] sm:$0xff]
    %v46 = vld [vmem:[#allocation5 + $0x18] sm:$0xff]
    %v47 = vld [vmem:[#allocation5 + $0x20] sm:$0xff]
    %v48 = vld [vmem:[#allocation5 + $0x28] sm:$0xff]
    %v49 = vld [vmem:[#allocation5 + $0x30] sm:$0xff]
    %v50 = vld [vmem:[#allocation5 + $0x38] sm:$0xff]
    %v51 = vld [vmem:[#allocation5 + $0x40] sm:$0xff]
    %v52 = vld [vmem:[#allocation5 + $0x48] sm:$0xff]
    %v53 = vld [vmem:[#allocation5 + $0x50] sm:$0xff]
    %v54 = vld [vmem:[#allocation5 + $0x58] sm:$0xff]
    %v55 = vld [vmem:[#allocation5 + $0x60] sm:$0xff]
    %v56 = vld [vmem:[#allocation5 + $0x68] sm:$0xff]
    %v57 = vld [vmem:[#allocation5 + $0x70] sm:$0xff]
    %v58 = vld [vmem:[#allocation5 + $0x78] sm:$0xff]
    %v59 = vld [vmem:[#allocation5 + $0x80] sm:$0xff]
    %v60 = vld [vmem:[#allocation5 + $0x88] sm:$0xff]
    %v61 = vld [vmem:[#allocation5 + $0x90] sm:$0xff]
    %v62 = vld [vmem:[#allocation5 + $0x98] sm:$0xff]
    %v63 = vld [vmem:[#allocation5 + $0xa0] sm:$0xff]
    %v64 = vld [vmem:[#allocation5 + $0xa8] sm:$0xff]
    %v65 = vld [vmem:[#allocation5 + $0xb0] sm:$0xff]
    %v66 = vld [vmem:[#allocation5 + $0xb8] sm:$0xff]
    %v67 = vld [vmem:[#allocation5 + $0xc0] sm:$0xff]
    %v68 = vld [vmem:[#allocation5 + $0xc8] sm:$0xff]
    %v69 = vld [vmem:[#allocation5 + $0xd0] sm:$0xff]
    %v70 = vld [vmem:[#allocation5 + $0xd8] sm:$0xff]
    %v71 = vld [vmem:[#allocation5 + $0xe0] sm:$0xff]
    %v72 = vld [vmem:[#allocation5 + $0xe8] sm:$0xff]
    %v73 = vld [vmem:[#allocation5 + $0xf0] sm:$0xff]
    %v74 = vld [vmem:[#allocation5 + $0xf8] sm:$0xff]
    %v75 = vld [vmem:[#allocation5 + $0x100] sm:$0xff]
    %v76 = vld [vmem:[#allocation5 + $0x108] sm:$0xff]
    %v77 = vld [vmem:[#allocation5 + $0x110] sm:$0xff]
    %v78 = vld [vmem:[#allocation5 + $0x118] sm:$0xff]
    %v79 = vld [vmem:[#allocation5 + $0x120] sm:$0xff]
    %v80 = vld [vmem:[#allocation5 + $0x128] sm:$0xff]
    %v81 = vld [vmem:[#allocation5 + $0x130] sm:$0xff]
    %v82 = vld [vmem:[#allocation5 + $0x138] sm:$0xff]
    %v83 = vld [vmem:[#allocation5 + $0x140] sm:$0xff]
    %v84 = vld [vmem:[#allocation5 + $0x148] sm:$0xff]
    %v85 = vld [vmem:[#allocation5 + $0x150] sm:$0xff]
    %v86 = vld [vmem:[#allocation5 + $0x158] sm:$0xff]
    %v87 = vld [vmem:[#allocation5 + $0x160] sm:$0xff]
    %v88 = vld [vmem:[#allocation5 + $0x168] sm:$0xff]
    %v89 = vld [vmem:[#allocation5 + $0x170] sm:$0xff]
    %v90 = vld [vmem:[#allocation5 + $0x178] sm:$0xff]
    %v91 = vld [vmem:[#allocation5 + $0x180] sm:$0xff]
    %v92 = vld [vmem:[#allocation5 + $0x188] sm:$0xff]
    %v93 = vld [vmem:[#allocation5 + $0x190] sm:$0xff]
    %v94 = vld [vmem:[#allocation5 + $0x198] sm:$0xff]
    %v95 = vld [vmem:[#allocation5 + $0x1a0] sm:$0xff]
    %v96 = vld [vmem:[#allocation5 + $0x1a8] sm:$0xff]
    %v97 = vld [vmem:[#allocation5 + $0x1b0] sm:$0xff]
    %v98 = vld [vmem:[#allocation5 + $0x1b8] sm:$0xff]
    %v99 = vld [vmem:[#allocation5 + $0x1c0] sm:$0xff]
    %v100 = vld [vmem:[#allocation5 + $0x1c8] sm:$0xff]
    %v101 = vld [vmem:[#allocation5 + $0x1d0] sm:$0xff]
    %v102 = vld [vmem:[#allocation5 + $0x1d8] sm:$0xff]
    %v103 = vld [vmem:[#allocation5 + $0x1e0] sm:$0xff]
    %v104 = vld [vmem:[#allocation5 + $0x1e8] sm:$0xff]
    %v105 = vld [vmem:[#allocation5 + $0x1f0] sm:$0xff]
    %v106 = vld [vmem:[#allocation5 + $0x1f8] sm:$0xff]
    %v107 = vand.u32 %v103, 4294901760
    %108 = vmatpush.msra.mxu0 %v107
    %v109 = vand.u32 %v99, 4294901760
    %110 = vmatpush.msra.mxu0 %v109
    %v111 = vand.u32 %v95, 4294901760
    %112 = vmatpush.msra.mxu0 %v111
    %v113 = vand.u32 %v91, 4294901760
    %114 = vmatpush.msra.mxu0 %v113
    %v115 = vand.u32 %v87, 4294901760
    %116 = vmatpush.msra.mxu0 %v115
    %v117 = vand.u32 %v83, 4294901760
    %118 = vmatpush.msra.mxu0 %v117
    %v119 = vand.u32 %v79, 4294901760
    %120 = vmatpush.msra.mxu0 %v119
    %v121 = vand.u32 %v75, 4294901760
    %122 = vmatpush.msra.mxu0 %v121
    %v123 = vand.u32 %v71, 4294901760
    %124 = vmatpush.msra.mxu0 %v123
    %v125 = vand.u32 %v67, 4294901760
    %126 = vmatpush.msra.mxu0 %v125
    %v127 = vand.u32 %v63, 4294901760
    %128 = vmatpush.msra.mxu0 %v127
    %v129 = vand.u32 %v59, 4294901760
    %130 = vmatpush.msra.mxu0 %v129
    %v131 = vand.u32 %v55, 4294901760
    %132 = vmatpush.msra.mxu0 %v131
    %v133 = vand.u32 %v51, 4294901760
    %134 = vmatpush.msra.mxu0 %v133
    %v135 = vand.u32 %v47, 4294901760
    %136 = vmatpush.msra.mxu0 %v135
    %v137 = vand.u32 %v43, 4294901760
    %138 = vmatpush.msra.mxu0 %v137
    %v139 = vand.u32 %v42, 4294901760
    %v140 = vsub.f32 %v42, %v139
    %v141 = vand.u32 %v140, 4294901760
    %v142 = vsub.f32 %v140, %v141
    %v143 = vand.u32 %v142, 4294901760
    %144 = vmatmul.f32.gmra.mxu0 %v143
    %v145 = vpop.f32.mrf.mxu0
    %v146 = vadd.f32 0.0, %v145
    %147 = vdwg.mxu0
    %v148 = vand.u32 %v103, 4294901760
    %v149 = vsub.f32 %v103, %v148
    %v150 = vand.u32 %v149, 4294901760
    %v151 = vsub.f32 %v149, %v150
    %v152 = vand.u32 %v151, 4294901760
    %153 = vmatpush.msra.mxu0 %v152
    %v154 = vand.u32 %v99, 4294901760
    %v155 = vsub.f32 %v99, %v154
    %v156 = vand.u32 %v155, 4294901760
    %v157 = vsub.f32 %v155, %v156
    %v158 = vand.u32 %v157, 4294901760
    %159 = vmatpush.msra.mxu0 %v158
    %v160 = vand.u32 %v95, 4294901760
    %v161 = vsub.f32 %v95, %v160
    %v162 = vand.u32 %v161, 4294901760
    %v163 = vsub.f32 %v161, %v162
    %v164 = vand.u32 %v163, 4294901760
    %165 = vmatpush.msra.mxu0 %v164
    %v166 = vand.u32 %v91, 4294901760
    %v167 = vsub.f32 %v91, %v166
    %v168 = vand.u32 %v167, 4294901760
    %v169 = vsub.f32 %v167, %v168
    %v170 = vand.u32 %v169, 4294901760
    %171 = vmatpush.msra.mxu0 %v170
    %v172 = vand.u32 %v87, 4294901760
    %v173 = vsub.f32 %v87, %v172
    %v174 = vand.u32 %v173, 4294901760
    %v175 = vsub.f32 %v173, %v174
    %v176 = vand.u32 %v175, 4294901760
    %177 = vmatpush.msra.mxu0 %v176
    %v178 = vand.u32 %v83, 4294901760
    %v179 = vsub.f32 %v83, %v178
    %v180 = vand.u32 %v179, 4294901760
    %v181 = vsub.f32 %v179, %v180
    %v182 = vand.u32 %v181, 4294901760
    %183 = vmatpush.msra.mxu0 %v182
    %v184 = vand.u32 %v79, 4294901760
    %v185 = vsub.f32 %v79, %v184
    %v186 = vand.u32 %v185, 4294901760
    %v187 = vsub.f32 %v185, %v186
    %v188 = vand.u32 %v187, 4294901760
    %189 = vmatpush.msra.mxu0 %v188
    %v190 = vand.u32 %v75, 4294901760
    %v191 = vsub.f32 %v75, %v190
    %v192 = vand.u32 %v191, 4294901760
    %v193 = vsub.f32 %v191, %v192
    %v194 = vand.u32 %v193, 4294901760
    %195 = vmatpush.msra.mxu0 %v194
    %v196 = vand.u32 %v71, 4294901760
    %v197 = vsub.f32 %v71, %v196
    %v198 = vand.u32 %v197, 4294901760
    %v199 = vsub.f32 %v197, %v198
    %v200 = vand.u32 %v199, 4294901760
    %201 = vmatpush.msra.mxu0 %v200
    %v202 = vand.u32 %v67, 4294901760
    %v203 = vsub.f32 %v67, %v202
    %v204 = vand.u32 %v203, 4294901760
    %v205 = vsub.f32 %v203, %v204
    %v206 = vand.u32 %v205, 4294901760
    %207 = vmatpush.msra.mxu0 %v206
    %v208 = vand.u32 %v63, 4294901760
    %v209 = vsub.f32 %v63, %v208
    %v210 = vand.u32 %v209, 4294901760
    %v211 = vsub.f32 %v209, %v210
    %v212 = vand.u32 %v211, 4294901760
    %213 = vmatpush.msra.mxu0 %v212
    %v214 = vand.u32 %v59, 4294901760
    %v215 = vsub.f32 %v59, %v214
    %v216 = vand.u32 %v215, 4294901760
    %v217 = vsub.f32 %v215, %v216
    %v218 = vand.u32 %v217, 4294901760
    %219 = vmatpush.msra.mxu0 %v218
    %v220 = vand.u32 %v55, 4294901760
    %v221 = vsub.f32 %v55, %v220
    %v222 = vand.u32 %v221, 4294901760
    %v223 = vsub.f32 %v221, %v222
    %v224 = vand.u32 %v223, 4294901760
    %225 = vmatpush.msra.mxu0 %v224
    %v226 = vand.u32 %v51, 4294901760
    %v227 = vsub.f32 %v51, %v226
    %v228 = vand.u32 %v227, 4294901760
    %v229 = vsub.f32 %v227, %v228
    %v230 = vand.u32 %v229, 4294901760
    %231 = vmatpush.msra.mxu0 %v230
    %v232 = vand.u32 %v47, 4294901760
    %v233 = vsub.f32 %v47, %v232
    %v234 = vand.u32 %v233, 4294901760
    %v235 = vsub.f32 %v233, %v234
    %v236 = vand.u32 %v235, 4294901760
    %237 = vmatpush.msra.mxu0 %v236
    %v238 = vand.u32 %v43, 4294901760
    %v239 = vsub.f32 %v43, %v238
    %v240 = vand.u32 %v239, 4294901760
    %v241 = vsub.f32 %v239, %v240
    %v242 = vand.u32 %v241, 4294901760
    %243 = vmatpush.msra.mxu0 %v242
    %v244 = vand.u32 %v42, 4294901760
    %245 = vmatmul.f32.gmra.mxu0 %v244
    %v246 = vpop.f32.mrf.mxu0
    %v247 = vadd.f32 %v146, %v246
    %248 = vdwg.mxu0
    %v249 = vand.u32 %v103, 4294901760
    %v250 = vsub.f32 %v103, %v249
    %251 = vmatpush.msra.mxu0 %v250
    %v252 = vand.u32 %v99, 4294901760
    %v253 = vsub.f32 %v99, %v252
    %254 = vmatpush.msra.mxu0 %v253
    %v255 = vand.u32 %v95, 4294901760
    %v256 = vsub.f32 %v95, %v255
    %257 = vmatpush.msra.mxu0 %v256
    %v258 = vand.u32 %v91, 4294901760
    %v259 = vsub.f32 %v91, %v258
    %260 = vmatpush.msra.mxu0 %v259
    %v261 = vand.u32 %v87, 4294901760
    %v262 = vsub.f32 %v87, %v261
    %263 = vmatpush.msra.mxu0 %v262
    %v264 = vand.u32 %v83, 4294901760
    %v265 = vsub.f32 %v83, %v264
    %266 = vmatpush.msra.mxu0 %v265
    %v267 = vand.u32 %v79, 4294901760
    %v268 = vsub.f32 %v79, %v267
    %269 = vmatpush.msra.mxu0 %v268
    %v270 = vand.u32 %v75, 4294901760
    %v271 = vsub.f32 %v75, %v270
    %272 = vmatpush.msra.mxu0 %v271
    %v273 = vand.u32 %v71, 4294901760
    %v274 = vsub.f32 %v71, %v273
    %275 = vmatpush.msra.mxu0 %v274
    %v276 = vand.u32 %v67, 4294901760
    %v277 = vsub.f32 %v67, %v276
    %278 = vmatpush.msra.mxu0 %v277
    %v279 = vand.u32 %v63, 4294901760
    %v280 = vsub.f32 %v63, %v279
    %281 = vmatpush.msra.mxu0 %v280
    %v282 = vand.u32 %v59, 4294901760
    %v283 = vsub.f32 %v59, %v282
    %284 = vmatpush.msra.mxu0 %v283
    %v285 = vand.u32 %v55, 4294901760
    %v286 = vsub.f32 %v55, %v285
    %287 = vmatpush.msra.mxu0 %v286
    %v288 = vand.u32 %v51, 4294901760
    %v289 = vsub.f32 %v51, %v288
    %290 = vmatpush.msra.mxu0 %v289
    %v291 = vand.u32 %v47, 4294901760
    %v292 = vsub.f32 %v47, %v291
    %293 = vmatpush.msra.mxu0 %v292
    %v294 = vand.u32 %v43, 4294901760
    %v295 = vsub.f32 %v43, %v294
    %296 = vmatpush.msra.mxu0 %v295
    %v297 = vand.u32 %v42, 4294901760
    %v298 = vsub.f32 %v42, %v297
    %299 = vmatmul.f32.gmra.mxu0 %v298
    %v300 = vpop.f32.mrf.mxu0
    %v301 = vadd.f32 %v247, %v300
    %302 = vdwg.mxu0
    %v303 = vand.u32 %v103, 4294901760
    %304 = vmatpush.msra.mxu0 %v303
    %v305 = vand.u32 %v99, 4294901760
    %306 = vmatpush.msra.mxu0 %v305
    %v307 = vand.u32 %v95, 4294901760
    %308 = vmatpush.msra.mxu0 %v307
    %v309 = vand.u32 %v91, 4294901760
    %310 = vmatpush.msra.mxu0 %v309
    %v311 = vand.u32 %v87, 4294901760
    %312 = vmatpush.msra.mxu0 %v311
    %v313 = vand.u32 %v83, 4294901760
    %314 = vmatpush.msra.mxu0 %v313
    %v315 = vand.u32 %v79, 4294901760
    %316 = vmatpush.msra.mxu0 %v315
    %v317 = vand.u32 %v75, 4294901760
    %318 = vmatpush.msra.mxu0 %v317
    %v319 = vand.u32 %v71, 4294901760
    %320 = vmatpush.msra.mxu0 %v319
    %v321 = vand.u32 %v67, 4294901760
    %322 = vmatpush.msra.mxu0 %v321
    %v323 = vand.u32 %v63, 4294901760
    %324 = vmatpush.msra.mxu0 %v323
    %v325 = vand.u32 %v59, 4294901760
    %326 = vmatpush.msra.mxu0 %v325
    %v327 = vand.u32 %v55, 4294901760
    %328 = vmatpush.msra.mxu0 %v327
    %v329 = vand.u32 %v51, 4294901760
    %330 = vmatpush.msra.mxu0 %v329
    %v331 = vand.u32 %v47, 4294901760
    %332 = vmatpush.msra.mxu0 %v331
    %v333 = vand.u32 %v43, 4294901760
    %334 = vmatpush.msra.mxu0 %v333
    %v335 = vand.u32 %v42, 4294901760
    %v336 = vsub.f32 %v42, %v335
    %v337 = vand.u32 %v336, 4294901760
    %338 = vmatmul.f32.gmra.mxu0 %v337
    %v339 = vpop.f32.mrf.mxu0
    %v340 = vadd.f32 %v301, %v339
    %341 = vdwg.mxu0
    %v342 = vand.u32 %v103, 4294901760
    %v343 = vsub.f32 %v103, %v342
    %v344 = vand.u32 %v343, 4294901760
    %345 = vmatpush.msra.mxu0 %v344
    %v346 = vand.u32 %v99, 4294901760
    %v347 = vsub.f32 %v99, %v346
    %v348 = vand.u32 %v347, 4294901760
    %349 = vmatpush.msra.mxu0 %v348
    %v350 = vand.u32 %v95, 4294901760
    %v351 = vsub.f32 %v95, %v350
    %v352 = vand.u32 %v351, 4294901760
    %353 = vmatpush.msra.mxu0 %v352
    %v354 = vand.u32 %v91, 4294901760
    %v355 = vsub.f32 %v91, %v354
    %v356 = vand.u32 %v355, 4294901760
    %357 = vmatpush.msra.mxu0 %v356
    %v358 = vand.u32 %v87, 4294901760
    %v359 = vsub.f32 %v87, %v358
    %v360 = vand.u32 %v359, 4294901760
    %361 = vmatpush.msra.mxu0 %v360
    %v362 = vand.u32 %v83, 4294901760
    %v363 = vsub.f32 %v83, %v362
    %v364 = vand.u32 %v363, 4294901760
    %365 = vmatpush.msra.mxu0 %v364
    %v366 = vand.u32 %v79, 4294901760
    %v367 = vsub.f32 %v79, %v366
    %v368 = vand.u32 %v367, 4294901760
    %369 = vmatpush.msra.mxu0 %v368
    %v370 = vand.u32 %v75, 4294901760
    %v371 = vsub.f32 %v75, %v370
    %v372 = vand.u32 %v371, 4294901760
    %373 = vmatpush.msra.mxu0 %v372
    %v374 = vand.u32 %v71, 4294901760
    %v375 = vsub.f32 %v71, %v374
    %v376 = vand.u32 %v375, 4294901760
    %377 = vmatpush.msra.mxu0 %v376
    %v378 = vand.u32 %v67, 4294901760
    %v379 = vsub.f32 %v67, %v378
    %v380 = vand.u32 %v379, 4294901760
    %381 = vmatpush.msra.mxu0 %v380
    %v382 = vand.u32 %v63, 4294901760
    %v383 = vsub.f32 %v63, %v382
    %v384 = vand.u32 %v383, 4294901760
    %385 = vmatpush.msra.mxu0 %v384
    %v386 = vand.u32 %v59, 4294901760
    %v387 = vsub.f32 %v59, %v386
    %v388 = vand.u32 %v387, 4294901760
    %389 = vmatpush.msra.mxu0 %v388
    %v390 = vand.u32 %v55, 4294901760
    %v391 = vsub.f32 %v55, %v390
    %v392 = vand.u32 %v391, 4294901760
    %393 = vmatpush.msra.mxu0 %v392
    %v394 = vand.u32 %v51, 4294901760
    %v395 = vsub.f32 %v51, %v394
    %v396 = vand.u32 %v395, 4294901760
    %397 = vmatpush.msra.mxu0 %v396
    %v398 = vand.u32 %v47, 4294901760
    %v399 = vsub.f32 %v47, %v398
    %v400 = vand.u32 %v399, 4294901760
    %401 = vmatpush.msra.mxu0 %v400
    %v402 = vand.u32 %v43, 4294901760
    %v403 = vsub.f32 %v43, %v402
    %v404 = vand.u32 %v403, 4294901760
    %405 = vmatpush.msra.mxu0 %v404
    %v406 = vand.u32 %v42, 4294901760
    %407 = vmatmul.f32.gmra.mxu0 %v406
    %v408 = vpop.f32.mrf.mxu0
    %v409 = vadd.f32 %v340, %v408
    %410 = vdwg.mxu0
    %v411 = vand.u32 %v103, 4294901760
    %412 = vmatpush.msra.mxu0 %v411
    %v413 = vand.u32 %v99, 4294901760
    %414 = vmatpush.msra.mxu0 %v413
    %v415 = vand.u32 %v95, 4294901760
    %416 = vmatpush.msra.mxu0 %v415
    %v417 = vand.u32 %v91, 4294901760
    %418 = vmatpush.msra.mxu0 %v417
    %v419 = vand.u32 %v87, 4294901760
    %420 = vmatpush.msra.mxu0 %v419
    %v421 = vand.u32 %v83, 4294901760
    %422 = vmatpush.msra.mxu0 %v421
    %v423 = vand.u32 %v79, 4294901760
    %424 = vmatpush.msra.mxu0 %v423
    %v425 = vand.u32 %v75, 4294901760
    %426 = vmatpush.msra.mxu0 %v425
    %v427 = vand.u32 %v71, 4294901760
    %428 = vmatpush.msra.mxu0 %v427
    %v429 = vand.u32 %v67, 4294901760
    %430 = vmatpush.msra.mxu0 %v429
    %v431 = vand.u32 %v63, 4294901760
    %432 = vmatpush.msra.mxu0 %v431
    %v433 = vand.u32 %v59, 4294901760
    %434 = vmatpush.msra.mxu0 %v433
    %v435 = vand.u32 %v55, 4294901760
    %436 = vmatpush.msra.mxu0 %v435
    %v437 = vand.u32 %v51, 4294901760
    %438 = vmatpush.msra.mxu0 %v437
    %v439 = vand.u32 %v47, 4294901760
    %440 = vmatpush.msra.mxu0 %v439
    %v441 = vand.u32 %v43, 4294901760
    %442 = vmatpush.msra.mxu0 %v441
    %v443 = vand.u32 %v42, 4294901760
    %444 = vmatmul.f32.gmra.mxu0 %v443
    %v445 = vpop.f32.mrf.mxu0
    %v446 = vadd.f32 %v409, %v445
    %447 = vdwg.mxu0
    %v448 = vand.u32 %v104, 4294901760
    %449 = vmatpush.msra.mxu0 %v448
    %v450 = vand.u32 %v100, 4294901760
    %451 = vmatpush.msra.mxu0 %v450
    %v452 = vand.u32 %v96, 4294901760
    %453 = vmatpush.msra.mxu0 %v452
    %v454 = vand.u32 %v92, 4294901760
    %455 = vmatpush.msra.mxu0 %v454
    %v456 = vand.u32 %v88, 4294901760
    %457 = vmatpush.msra.mxu0 %v456
    %v458 = vand.u32 %v84, 4294901760
    %459 = vmatpush.msra.mxu0 %v458
    %v460 = vand.u32 %v80, 4294901760
    %461 = vmatpush.msra.mxu0 %v460
    %v462 = vand.u32 %v76, 4294901760
    %463 = vmatpush.msra.mxu0 %v462
    %v464 = vand.u32 %v72, 4294901760
    %465 = vmatpush.msra.mxu0 %v464
    %v466 = vand.u32 %v68, 4294901760
    %467 = vmatpush.msra.mxu0 %v466
    %v468 = vand.u32 %v64, 4294901760
    %469 = vmatpush.msra.mxu0 %v468
    %v470 = vand.u32 %v60, 4294901760
    %471 = vmatpush.msra.mxu0 %v470
    %v472 = vand.u32 %v56, 4294901760
    %473 = vmatpush.msra.mxu0 %v472
    %v474 = vand.u32 %v52, 4294901760
    %475 = vmatpush.msra.mxu0 %v474
    %v476 = vand.u32 %v48, 4294901760
    %477 = vmatpush.msra.mxu0 %v476
    %v478 = vand.u32 %v44, 4294901760
    %479 = vmatpush.msra.mxu0 %v478
    %v480 = vand.u32 %v42, 4294901760
    %v481 = vsub.f32 %v42, %v480
    %v482 = vand.u32 %v481, 4294901760
    %v483 = vsub.f32 %v481, %v482
    %v484 = vand.u32 %v483, 4294901760
    %485 = vmatmul.f32.gmra.mxu0 %v484
    %v486 = vpop.f32.mrf.mxu0
    %v487 = vadd.f32 0.0, %v486
    %488 = vdwg.mxu0
    %v489 = vand.u32 %v104, 4294901760
    %v490 = vsub.f32 %v104, %v489
    %v491 = vand.u32 %v490, 4294901760
    %v492 = vsub.f32 %v490, %v491
    %v493 = vand.u32 %v492, 4294901760
    %494 = vmatpush.msra.mxu0 %v493
    %v495 = vand.u32 %v100, 4294901760
    %v496 = vsub.f32 %v100, %v495
    %v497 = vand.u32 %v496, 4294901760
    %v498 = vsub.f32 %v496, %v497
    %v499 = vand.u32 %v498, 4294901760
    %500 = vmatpush.msra.mxu0 %v499
    %v501 = vand.u32 %v96, 4294901760
    %v502 = vsub.f32 %v96, %v501
    %v503 = vand.u32 %v502, 4294901760
    %v504 = vsub.f32 %v502, %v503
    %v505 = vand.u32 %v504, 4294901760
    %506 = vmatpush.msra.mxu0 %v505
    %v507 = vand.u32 %v92, 4294901760
    %v508 = vsub.f32 %v92, %v507
    %v509 = vand.u32 %v508, 4294901760
    %v510 = vsub.f32 %v508, %v509
    %v511 = vand.u32 %v510, 4294901760
    %512 = vmatpush.msra.mxu0 %v511
    %v513 = vand.u32 %v88, 4294901760
    %v514 = vsub.f32 %v88, %v513
    %v515 = vand.u32 %v514, 4294901760
    %v516 = vsub.f32 %v514, %v515
    %v517 = vand.u32 %v516, 4294901760
    %518 = vmatpush.msra.mxu0 %v517
    %v519 = vand.u32 %v84, 4294901760
    %v520 = vsub.f32 %v84, %v519
    %v521 = vand.u32 %v520, 4294901760
    %v522 = vsub.f32 %v520, %v521
    %v523 = vand.u32 %v522, 4294901760
    %524 = vmatpush.msra.mxu0 %v523
    %v525 = vand.u32 %v80, 4294901760
    %v526 = vsub.f32 %v80, %v525
    %v527 = vand.u32 %v526, 4294901760
    %v528 = vsub.f32 %v526, %v527
    %v529 = vand.u32 %v528, 4294901760
    %530 = vmatpush.msra.mxu0 %v529
    %v531 = vand.u32 %v76, 4294901760
    %v532 = vsub.f32 %v76, %v531
    %v533 = vand.u32 %v532, 4294901760
    %v534 = vsub.f32 %v532, %v533
    %v535 = vand.u32 %v534, 4294901760
    %536 = vmatpush.msra.mxu0 %v535
    %v537 = vand.u32 %v72, 4294901760
    %v538 = vsub.f32 %v72, %v537
    %v539 = vand.u32 %v538, 4294901760
    %v540 = vsub.f32 %v538, %v539
    %v541 = vand.u32 %v540, 4294901760
    %542 = vmatpush.msra.mxu0 %v541
    %v543 = vand.u32 %v68, 4294901760
    %v544 = vsub.f32 %v68, %v543
    %v545 = vand.u32 %v544, 4294901760
    %v546 = vsub.f32 %v544, %v545
    %v547 = vand.u32 %v546, 4294901760
    %548 = vmatpush.msra.mxu0 %v547
    %v549 = vand.u32 %v64, 4294901760
    %v550 = vsub.f32 %v64, %v549
    %v551 = vand.u32 %v550, 4294901760
    %v552 = vsub.f32 %v550, %v551
    %v553 = vand.u32 %v552, 4294901760
    %554 = vmatpush.msra.mxu0 %v553
    %v555 = vand.u32 %v60, 4294901760
    %v556 = vsub.f32 %v60, %v555
    %v557 = vand.u32 %v556, 4294901760
    %v558 = vsub.f32 %v556, %v557
    %v559 = vand.u32 %v558, 4294901760
    %560 = vmatpush.msra.mxu0 %v559
    %v561 = vand.u32 %v56, 4294901760
    %v562 = vsub.f32 %v56, %v561
    %v563 = vand.u32 %v562, 4294901760
    %v564 = vsub.f32 %v562, %v563
    %v565 = vand.u32 %v564, 4294901760
    %566 = vmatpush.msra.mxu0 %v565
    %v567 = vand.u32 %v52, 4294901760
    %v568 = vsub.f32 %v52, %v567
    %v569 = vand.u32 %v568, 4294901760
    %v570 = vsub.f32 %v568, %v569
    %v571 = vand.u32 %v570, 4294901760
    %572 = vmatpush.msra.mxu0 %v571
    %v573 = vand.u32 %v48, 4294901760
    %v574 = vsub.f32 %v48, %v573
    %v575 = vand.u32 %v574, 4294901760
    %v576 = vsub.f32 %v574, %v575
    %v577 = vand.u32 %v576, 4294901760
    %578 = vmatpush.msra.mxu0 %v577
    %v579 = vand.u32 %v44, 4294901760
    %v580 = vsub.f32 %v44, %v579
    %v581 = vand.u32 %v580, 4294901760
    %v582 = vsub.f32 %v580, %v581
    %v583 = vand.u32 %v582, 4294901760
    %584 = vmatpush.msra.mxu0 %v583
    %v585 = vand.u32 %v42, 4294901760
    %586 = vmatmul.f32.gmra.mxu0 %v585
    %v587 = vpop.f32.mrf.mxu0
    %v588 = vadd.f32 %v487, %v587
    %589 = vdwg.mxu0
    %v590 = vand.u32 %v104, 4294901760
    %v591 = vsub.f32 %v104, %v590
    %592 = vmatpush.msra.mxu0 %v591
    %v593 = vand.u32 %v100, 4294901760
    %v594 = vsub.f32 %v100, %v593
    %595 = vmatpush.msra.mxu0 %v594
    %v596 = vand.u32 %v96, 4294901760
    %v597 = vsub.f32 %v96, %v596
    %598 = vmatpush.msra.mxu0 %v597
    %v599 = vand.u32 %v92, 4294901760
    %v600 = vsub.f32 %v92, %v599
    %601 = vmatpush.msra.mxu0 %v600
    %v602 = vand.u32 %v88, 4294901760
    %v603 = vsub.f32 %v88, %v602
    %604 = vmatpush.msra.mxu0 %v603
    %v605 = vand.u32 %v84, 4294901760
    %v606 = vsub.f32 %v84, %v605
    %607 = vmatpush.msra.mxu0 %v606
    %v608 = vand.u32 %v80, 4294901760
    %v609 = vsub.f32 %v80, %v608
    %610 = vmatpush.msra.mxu0 %v609
    %v611 = vand.u32 %v76, 4294901760
    %v612 = vsub.f32 %v76, %v611
    %613 = vmatpush.msra.mxu0 %v612
    %v614 = vand.u32 %v72, 4294901760
    %v615 = vsub.f32 %v72, %v614
    %616 = vmatpush.msra.mxu0 %v615
    %v617 = vand.u32 %v68, 4294901760
    %v618 = vsub.f32 %v68, %v617
    %619 = vmatpush.msra.mxu0 %v618
    %v620 = vand.u32 %v64, 4294901760
    %v621 = vsub.f32 %v64, %v620
    %622 = vmatpush.msra.mxu0 %v621
    %v623 = vand.u32 %v60, 4294901760
    %v624 = vsub.f32 %v60, %v623
    %625 = vmatpush.msra.mxu0 %v624
    %v626 = vand.u32 %v56, 4294901760
    %v627 = vsub.f32 %v56, %v626
    %628 = vmatpush.msra.mxu0 %v627
    %v629 = vand.u32 %v52, 4294901760
    %v630 = vsub.f32 %v52, %v629
    %631 = vmatpush.msra.mxu0 %v630
    %v632 = vand.u32 %v48, 4294901760
    %v633 = vsub.f32 %v48, %v632
    %634 = vmatpush.msra.mxu0 %v633
    %v635 = vand.u32 %v44, 4294901760
    %v636 = vsub.f32 %v44, %v635
    %637 = vmatpush.msra.mxu0 %v636
    %v638 = vand.u32 %v42, 4294901760
    %v639 = vsub.f32 %v42, %v638
    %640 = vmatmul.f32.gmra.mxu0 %v639
    %v641 = vpop.f32.mrf.mxu0
    %v642 = vadd.f32 %v588, %v641
    %643 = vdwg.mxu0
    %v644 = vand.u32 %v104, 4294901760
    %645 = vmatpush.msra.mxu0 %v644
    %v646 = vand.u32 %v100, 4294901760
    %647 = vmatpush.msra.mxu0 %v646
    %v648 = vand.u32 %v96, 4294901760
    %649 = vmatpush.msra.mxu0 %v648
    %v650 = vand.u32 %v92, 4294901760
    %651 = vmatpush.msra.mxu0 %v650
    %v652 = vand.u32 %v88, 4294901760
    %653 = vmatpush.msra.mxu0 %v652
    %v654 = vand.u32 %v84, 4294901760
    %655 = vmatpush.msra.mxu0 %v654
    %v656 = vand.u32 %v80, 4294901760
    %657 = vmatpush.msra.mxu0 %v656
    %v658 = vand.u32 %v76, 4294901760
    %659 = vmatpush.msra.mxu0 %v658
    %v660 = vand.u32 %v72, 4294901760
    %661 = vmatpush.msra.mxu0 %v660
    %v662 = vand.u32 %v68, 4294901760
    %663 = vmatpush.msra.mxu0 %v662
    %v664 = vand.u32 %v64, 4294901760
    %665 = vmatpush.msra.mxu0 %v664
    %v666 = vand.u32 %v60, 4294901760
    %667 = vmatpush.msra.mxu0 %v666
    %v668 = vand.u32 %v56, 4294901760
    %669 = vmatpush.msra.mxu0 %v668
    %v670 = vand.u32 %v52, 4294901760
    %671 = vmatpush.msra.mxu0 %v670
    %v672 = vand.u32 %v48, 4294901760
    %673 = vmatpush.msra.mxu0 %v672
    %v674 = vand.u32 %v44, 4294901760
    %675 = vmatpush.msra.mxu0 %v674
    %v676 = vand.u32 %v42, 4294901760
    %v677 = vsub.f32 %v42, %v676
    %v678 = vand.u32 %v677, 4294901760
    %679 = vmatmul.f32.gmra.mxu0 %v678
    %v680 = vpop.f32.mrf.mxu0
    %v681 = vadd.f32 %v642, %v680
    %682 = vdwg.mxu0
    %v683 = vand.u32 %v104, 4294901760
    %v684 = vsub.f32 %v104, %v683
    %v685 = vand.u32 %v684, 4294901760
    %686 = vmatpush.msra.mxu0 %v685
    %v687 = vand.u32 %v100, 4294901760
    %v688 = vsub.f32 %v100, %v687
    %v689 = vand.u32 %v688, 4294901760
    %690 = vmatpush.msra.mxu0 %v689
    %v691 = vand.u32 %v96, 4294901760
    %v692 = vsub.f32 %v96, %v691
    %v693 = vand.u32 %v692, 4294901760
    %694 = vmatpush.msra.mxu0 %v693
    %v695 = vand.u32 %v92, 4294901760
    %v696 = vsub.f32 %v92, %v695
    %v697 = vand.u32 %v696, 4294901760
    %698 = vmatpush.msra.mxu0 %v697
    %v699 = vand.u32 %v88, 4294901760
    %v700 = vsub.f32 %v88, %v699
    %v701 = vand.u32 %v700, 4294901760
    %702 = vmatpush.msra.mxu0 %v701
    %v703 = vand.u32 %v84, 4294901760
    %v704 = vsub.f32 %v84, %v703
    %v705 = vand.u32 %v704, 4294901760
    %706 = vmatpush.msra.mxu0 %v705
    %v707 = vand.u32 %v80, 4294901760
    %v708 = vsub.f32 %v80, %v707
    %v709 = vand.u32 %v708, 4294901760
    %710 = vmatpush.msra.mxu0 %v709
    %v711 = vand.u32 %v76, 4294901760
    %v712 = vsub.f32 %v76, %v711
    %v713 = vand.u32 %v712, 4294901760
    %714 = vmatpush.msra.mxu0 %v713
    %v715 = vand.u32 %v72, 4294901760
    %v716 = vsub.f32 %v72, %v715
    %v717 = vand.u32 %v716, 4294901760
    %718 = vmatpush.msra.mxu0 %v717
    %v719 = vand.u32 %v68, 4294901760
    %v720 = vsub.f32 %v68, %v719
    %v721 = vand.u32 %v720, 4294901760
    %722 = vmatpush.msra.mxu0 %v721
    %v723 = vand.u32 %v64, 4294901760
    %v724 = vsub.f32 %v64, %v723
    %v725 = vand.u32 %v724, 4294901760
    %726 = vmatpush.msra.mxu0 %v725
    %v727 = vand.u32 %v60, 4294901760
    %v728 = vsub.f32 %v60, %v727
    %v729 = vand.u32 %v728, 4294901760
    %730 = vmatpush.msra.mxu0 %v729
    %v731 = vand.u32 %v56, 4294901760
    %v732 = vsub.f32 %v56, %v731
    %v733 = vand.u32 %v732, 4294901760
    %734 = vmatpush.msra.mxu0 %v733
    %v735 = vand.u32 %v52, 4294901760
    %v736 = vsub.f32 %v52, %v735
    %v737 = vand.u32 %v736, 4294901760
    %738 = vmatpush.msra.mxu0 %v737
    %v739 = vand.u32 %v48, 4294901760
    %v740 = vsub.f32 %v48, %v739
    %v741 = vand.u32 %v740, 4294901760
    %742 = vmatpush.msra.mxu0 %v741
    %v743 = vand.u32 %v44, 4294901760
    %v744 = vsub.f32 %v44, %v743
    %v745 = vand.u32 %v744, 4294901760
    %746 = vmatpush.msra.mxu0 %v745
    %v747 = vand.u32 %v42, 4294901760
    %748 = vmatmul.f32.gmra.mxu0 %v747
    %v749 = vpop.f32.mrf.mxu0
    %v750 = vadd.f32 %v681, %v749
    %751 = vdwg.mxu0
    %v752 = vand.u32 %v104, 4294901760
    %753 = vmatpush.msra.mxu0 %v752
    %v754 = vand.u32 %v100, 4294901760
    %755 = vmatpush.msra.mxu0 %v754
    %v756 = vand.u32 %v96, 4294901760
    %757 = vmatpush.msra.mxu0 %v756
    %v758 = vand.u32 %v92, 4294901760
    %759 = vmatpush.msra.mxu0 %v758
    %v760 = vand.u32 %v88, 4294901760
    %761 = vmatpush.msra.mxu0 %v760
    %v762 = vand.u32 %v84, 4294901760
    %763 = vmatpush.msra.mxu0 %v762
    %v764 = vand.u32 %v80, 4294901760
    %765 = vmatpush.msra.mxu0 %v764
    %v766 = vand.u32 %v76, 4294901760
    %767 = vmatpush.msra.mxu0 %v766
    %v768 = vand.u32 %v72, 4294901760
    %769 = vmatpush.msra.mxu0 %v768
    %v770 = vand.u32 %v68, 4294901760
    %771 = vmatpush.msra.mxu0 %v770
    %v772 = vand.u32 %v64, 4294901760
    %773 = vmatpush.msra.mxu0 %v772
    %v774 = vand.u32 %v60, 4294901760
    %775 = vmatpush.msra.mxu0 %v774
    %v776 = vand.u32 %v56, 4294901760
    %777 = vmatpush.msra.mxu0 %v776
    %v778 = vand.u32 %v52, 4294901760
    %779 = vmatpush.msra.mxu0 %v778
    %v780 = vand.u32 %v48, 4294901760
    %781 = vmatpush.msra.mxu0 %v780
    %v782 = vand.u32 %v44, 4294901760
    %783 = vmatpush.msra.mxu0 %v782
    %v784 = vand.u32 %v42, 4294901760
    %785 = vmatmul.f32.gmra.mxu0 %v784
    %v786 = vpop.f32.mrf.mxu0
    %v787 = vadd.f32 %v750, %v786
    %788 = vdwg.mxu0
    %v789 = vand.u32 %v105, 4294901760
    %790 = vmatpush.msra.mxu0 %v789
    %v791 = vand.u32 %v101, 4294901760
    %792 = vmatpush.msra.mxu0 %v791
    %v793 = vand.u32 %v97, 4294901760
    %794 = vmatpush.msra.mxu0 %v793
    %v795 = vand.u32 %v93, 4294901760
    %796 = vmatpush.msra.mxu0 %v795
    %v797 = vand.u32 %v89, 4294901760
    %798 = vmatpush.msra.mxu0 %v797
    %v799 = vand.u32 %v85, 4294901760
    %800 = vmatpush.msra.mxu0 %v799
    %v801 = vand.u32 %v81, 4294901760
    %802 = vmatpush.msra.mxu0 %v801
    %v803 = vand.u32 %v77, 4294901760
    %804 = vmatpush.msra.mxu0 %v803
    %v805 = vand.u32 %v73, 4294901760
    %806 = vmatpush.msra.mxu0 %v805
    %v807 = vand.u32 %v69, 4294901760
    %808 = vmatpush.msra.mxu0 %v807
    %v809 = vand.u32 %v65, 4294901760
    %810 = vmatpush.msra.mxu0 %v809
    %v811 = vand.u32 %v61, 4294901760
    %812 = vmatpush.msra.mxu0 %v811
    %v813 = vand.u32 %v57, 4294901760
    %814 = vmatpush.msra.mxu0 %v813
    %v815 = vand.u32 %v53, 4294901760
    %816 = vmatpush.msra.mxu0 %v815
    %v817 = vand.u32 %v49, 4294901760
    %818 = vmatpush.msra.mxu0 %v817
    %v819 = vand.u32 %v45, 4294901760
    %820 = vmatpush.msra.mxu0 %v819
    %v821 = vand.u32 %v42, 4294901760
    %v822 = vsub.f32 %v42, %v821
    %v823 = vand.u32 %v822, 4294901760
    %v824 = vsub.f32 %v822, %v823
    %v825 = vand.u32 %v824, 4294901760
    %826 = vmatmul.f32.gmra.mxu0 %v825
    %v827 = vpop.f32.mrf.mxu0
    %v828 = vadd.f32 0.0, %v827
    %829 = vdwg.mxu0
    %v830 = vand.u32 %v105, 4294901760
    %v831 = vsub.f32 %v105, %v830
    %v832 = vand.u32 %v831, 4294901760
    %v833 = vsub.f32 %v831, %v832
    %v834 = vand.u32 %v833, 4294901760
    %835 = vmatpush.msra.mxu0 %v834
    %v836 = vand.u32 %v101, 4294901760
    %v837 = vsub.f32 %v101, %v836
    %v838 = vand.u32 %v837, 4294901760
    %v839 = vsub.f32 %v837, %v838
    %v840 = vand.u32 %v839, 4294901760
    %841 = vmatpush.msra.mxu0 %v840
    %v842 = vand.u32 %v97, 4294901760
    %v843 = vsub.f32 %v97, %v842
    %v844 = vand.u32 %v843, 4294901760
    %v845 = vsub.f32 %v843, %v844
    %v846 = vand.u32 %v845, 4294901760
    %847 = vmatpush.msra.mxu0 %v846
    %v848 = vand.u32 %v93, 4294901760
    %v849 = vsub.f32 %v93, %v848
    %v850 = vand.u32 %v849, 4294901760
    %v851 = vsub.f32 %v849, %v850
    %v852 = vand.u32 %v851, 4294901760
    %853 = vmatpush.msra.mxu0 %v852
    %v854 = vand.u32 %v89, 4294901760
    %v855 = vsub.f32 %v89, %v854
    %v856 = vand.u32 %v855, 4294901760
    %v857 = vsub.f32 %v855, %v856
    %v858 = vand.u32 %v857, 4294901760
    %859 = vmatpush.msra.mxu0 %v858
    %v860 = vand.u32 %v85, 4294901760
    %v861 = vsub.f32 %v85, %v860
    %v862 = vand.u32 %v861, 4294901760
    %v863 = vsub.f32 %v861, %v862
    %v864 = vand.u32 %v863, 4294901760
    %865 = vmatpush.msra.mxu0 %v864
    %v866 = vand.u32 %v81, 4294901760
    %v867 = vsub.f32 %v81, %v866
    %v868 = vand.u32 %v867, 4294901760
    %v869 = vsub.f32 %v867, %v868
    %v870 = vand.u32 %v869, 4294901760
    %871 = vmatpush.msra.mxu0 %v870
    %v872 = vand.u32 %v77, 4294901760
    %v873 = vsub.f32 %v77, %v872
    %v874 = vand.u32 %v873, 4294901760
    %v875 = vsub.f32 %v873, %v874
    %v876 = vand.u32 %v875, 4294901760
    %877 = vmatpush.msra.mxu0 %v876
    %v878 = vand.u32 %v73, 4294901760
    %v879 = vsub.f32 %v73, %v878
    %v880 = vand.u32 %v879, 4294901760
    %v881 = vsub.f32 %v879, %v880
    %v882 = vand.u32 %v881, 4294901760
    %883 = vmatpush.msra.mxu0 %v882
    %v884 = vand.u32 %v69, 4294901760
    %v885 = vsub.f32 %v69, %v884
    %v886 = vand.u32 %v885, 4294901760
    %v887 = vsub.f32 %v885, %v886
    %v888 = vand.u32 %v887, 4294901760
    %889 = vmatpush.msra.mxu0 %v888
    %v890 = vand.u32 %v65, 4294901760
    %v891 = vsub.f32 %v65, %v890
    %v892 = vand.u32 %v891, 4294901760
    %v893 = vsub.f32 %v891, %v892
    %v894 = vand.u32 %v893, 4294901760
    %895 = vmatpush.msra.mxu0 %v894
    %v896 = vand.u32 %v61, 4294901760
    %v897 = vsub.f32 %v61, %v896
    %v898 = vand.u32 %v897, 4294901760
    %v899 = vsub.f32 %v897, %v898
    %v900 = vand.u32 %v899, 4294901760
    %901 = vmatpush.msra.mxu0 %v900
    %v902 = vand.u32 %v57, 4294901760
    %v903 = vsub.f32 %v57, %v902
    %v904 = vand.u32 %v903, 4294901760
    %v905 = vsub.f32 %v903, %v904
    %v906 = vand.u32 %v905, 4294901760
    %907 = vmatpush.msra.mxu0 %v906
    %v908 = vand.u32 %v53, 4294901760
    %v909 = vsub.f32 %v53, %v908
    %v910 = vand.u32 %v909, 4294901760
    %v911 = vsub.f32 %v909, %v910
    %v912 = vand.u32 %v911, 4294901760
    %913 = vmatpush.msra.mxu0 %v912
    %v914 = vand.u32 %v49, 4294901760
    %v915 = vsub.f32 %v49, %v914
    %v916 = vand.u32 %v915, 4294901760
    %v917 = vsub.f32 %v915, %v916
    %v918 = vand.u32 %v917, 4294901760
    %919 = vmatpush.msra.mxu0 %v918
    %v920 = vand.u32 %v45, 4294901760
    %v921 = vsub.f32 %v45, %v920
    %v922 = vand.u32 %v921, 4294901760
    %v923 = vsub.f32 %v921, %v922
    %v924 = vand.u32 %v923, 4294901760
    %925 = vmatpush.msra.mxu0 %v924
    %v926 = vand.u32 %v42, 4294901760
    %927 = vmatmul.f32.gmra.mxu0 %v926
    %v928 = vpop.f32.mrf.mxu0
    %v929 = vadd.f32 %v828, %v928
    %930 = vdwg.mxu0
    %v931 = vand.u32 %v105, 4294901760
    %v932 = vsub.f32 %v105, %v931
    %933 = vmatpush.msra.mxu0 %v932
    %v934 = vand.u32 %v101, 4294901760
    %v935 = vsub.f32 %v101, %v934
    %936 = vmatpush.msra.mxu0 %v935
    %v937 = vand.u32 %v97, 4294901760
    %v938 = vsub.f32 %v97, %v937
    %939 = vmatpush.msra.mxu0 %v938
    %v940 = vand.u32 %v93, 4294901760
    %v941 = vsub.f32 %v93, %v940
    %942 = vmatpush.msra.mxu0 %v941
    %v943 = vand.u32 %v89, 4294901760
    %v944 = vsub.f32 %v89, %v943
    %945 = vmatpush.msra.mxu0 %v944
    %v946 = vand.u32 %v85, 4294901760
    %v947 = vsub.f32 %v85, %v946
    %948 = vmatpush.msra.mxu0 %v947
    %v949 = vand.u32 %v81, 4294901760
    %v950 = vsub.f32 %v81, %v949
    %951 = vmatpush.msra.mxu0 %v950
    %v952 = vand.u32 %v77, 4294901760
    %v953 = vsub.f32 %v77, %v952
    %954 = vmatpush.msra.mxu0 %v953
    %v955 = vand.u32 %v73, 4294901760
    %v956 = vsub.f32 %v73, %v955
    %957 = vmatpush.msra.mxu0 %v956
    %v958 = vand.u32 %v69, 4294901760
    %v959 = vsub.f32 %v69, %v958
    %960 = vmatpush.msra.mxu0 %v959
    %v961 = vand.u32 %v65, 4294901760
    %v962 = vsub.f32 %v65, %v961
    %963 = vmatpush.msra.mxu0 %v962
    %v964 = vand.u32 %v61, 4294901760
    %v965 = vsub.f32 %v61, %v964
    %966 = vmatpush.msra.mxu0 %v965
    %v967 = vand.u32 %v57, 4294901760
    %v968 = vsub.f32 %v57, %v967
    %969 = vmatpush.msra.mxu0 %v968
    %v970 = vand.u32 %v53, 4294901760
    %v971 = vsub.f32 %v53, %v970
    %972 = vmatpush.msra.mxu0 %v971
    %v973 = vand.u32 %v49, 4294901760
    %v974 = vsub.f32 %v49, %v973
    %975 = vmatpush.msra.mxu0 %v974
    %v976 = vand.u32 %v45, 4294901760
    %v977 = vsub.f32 %v45, %v976
    %978 = vmatpush.msra.mxu0 %v977
    %v979 = vand.u32 %v42, 4294901760
    %v980 = vsub.f32 %v42, %v979
    %981 = vmatmul.f32.gmra.mxu0 %v980
    %v982 = vpop.f32.mrf.mxu0
    %v983 = vadd.f32 %v929, %v982
    %984 = vdwg.mxu0
    %v985 = vand.u32 %v105, 4294901760
    %986 = vmatpush.msra.mxu0 %v985
    %v987 = vand.u32 %v101, 4294901760
    %988 = vmatpush.msra.mxu0 %v987
    %v989 = vand.u32 %v97, 4294901760
    %990 = vmatpush.msra.mxu0 %v989
    %v991 = vand.u32 %v93, 4294901760
    %992 = vmatpush.msra.mxu0 %v991
    %v993 = vand.u32 %v89, 4294901760
    %994 = vmatpush.msra.mxu0 %v993
    %v995 = vand.u32 %v85, 4294901760
    %996 = vmatpush.msra.mxu0 %v995
    %v997 = vand.u32 %v81, 4294901760
    %998 = vmatpush.msra.mxu0 %v997
    %v999 = vand.u32 %v77, 4294901760
    %1000 = vmatpush.msra.mxu0 %v999
    %v1001 = vand.u32 %v73, 4294901760
    %1002 = vmatpush.msra.mxu0 %v1001
    %v1003 = vand.u32 %v69, 4294901760
    %1004 = vmatpush.msra.mxu0 %v1003
    %v1005 = vand.u32 %v65, 4294901760
    %1006 = vmatpush.msra.mxu0 %v1005
    %v1007 = vand.u32 %v61, 4294901760
    %1008 = vmatpush.msra.mxu0 %v1007
    %v1009 = vand.u32 %v57, 4294901760
    %1010 = vmatpush.msra.mxu0 %v1009
    %v1011 = vand.u32 %v53, 4294901760
    %1012 = vmatpush.msra.mxu0 %v1011
    %v1013 = vand.u32 %v49, 4294901760
    %1014 = vmatpush.msra.mxu0 %v1013
    %v1015 = vand.u32 %v45, 4294901760
    %1016 = vmatpush.msra.mxu0 %v1015
    %v1017 = vand.u32 %v42, 4294901760
    %v1018 = vsub.f32 %v42, %v1017
    %v1019 = vand.u32 %v1018, 4294901760
    %1020 = vmatmul.f32.gmra.mxu0 %v1019
    %v1021 = vpop.f32.mrf.mxu0
    %v1022 = vadd.f32 %v983, %v1021
    %1023 = vdwg.mxu0
    %v1024 = vand.u32 %v105, 4294901760
    %v1025 = vsub.f32 %v105, %v1024
    %v1026 = vand.u32 %v1025, 4294901760
    %1027 = vmatpush.msra.mxu0 %v1026
    %v1028 = vand.u32 %v101, 4294901760
    %v1029 = vsub.f32 %v101, %v1028
    %v1030 = vand.u32 %v1029, 4294901760
    %1031 = vmatpush.msra.mxu0 %v1030
    %v1032 = vand.u32 %v97, 4294901760
    %v1033 = vsub.f32 %v97, %v1032
    %v1034 = vand.u32 %v1033, 4294901760
    %1035 = vmatpush.msra.mxu0 %v1034
    %v1036 = vand.u32 %v93, 4294901760
    %v1037 = vsub.f32 %v93, %v1036
    %v1038 = vand.u32 %v1037, 4294901760
    %1039 = vmatpush.msra.mxu0 %v1038
    %v1040 = vand.u32 %v89, 4294901760
    %v1041 = vsub.f32 %v89, %v1040
    %v1042 = vand.u32 %v1041, 4294901760
    %1043 = vmatpush.msra.mxu0 %v1042
    %v1044 = vand.u32 %v85, 4294901760
    %v1045 = vsub.f32 %v85, %v1044
    %v1046 = vand.u32 %v1045, 4294901760
    %1047 = vmatpush.msra.mxu0 %v1046
    %v1048 = vand.u32 %v81, 4294901760
    %v1049 = vsub.f32 %v81, %v1048
    %v1050 = vand.u32 %v1049, 4294901760
    %1051 = vmatpush.msra.mxu0 %v1050
    %v1052 = vand.u32 %v77, 4294901760
    %v1053 = vsub.f32 %v77, %v1052
    %v1054 = vand.u32 %v1053, 4294901760
    %1055 = vmatpush.msra.mxu0 %v1054
    %v1056 = vand.u32 %v73, 4294901760
    %v1057 = vsub.f32 %v73, %v1056
    %v1058 = vand.u32 %v1057, 4294901760
    %1059 = vmatpush.msra.mxu0 %v1058
    %v1060 = vand.u32 %v69, 4294901760
    %v1061 = vsub.f32 %v69, %v1060
    %v1062 = vand.u32 %v1061, 4294901760
    %1063 = vmatpush.msra.mxu0 %v1062
    %v1064 = vand.u32 %v65, 4294901760
    %v1065 = vsub.f32 %v65, %v1064
    %v1066 = vand.u32 %v1065, 4294901760
    %1067 = vmatpush.msra.mxu0 %v1066
    %v1068 = vand.u32 %v61, 4294901760
    %v1069 = vsub.f32 %v61, %v1068
    %v1070 = vand.u32 %v1069, 4294901760
    %1071 = vmatpush.msra.mxu0 %v1070
    %v1072 = vand.u32 %v57, 4294901760
    %v1073 = vsub.f32 %v57, %v1072
    %v1074 = vand.u32 %v1073, 4294901760
    %1075 = vmatpush.msra.mxu0 %v1074
    %v1076 = vand.u32 %v53, 4294901760
    %v1077 = vsub.f32 %v53, %v1076
    %v1078 = vand.u32 %v1077, 4294901760
    %1079 = vmatpush.msra.mxu0 %v1078
    %v1080 = vand.u32 %v49, 4294901760
    %v1081 = vsub.f32 %v49, %v1080
    %v1082 = vand.u32 %v1081, 4294901760
    %1083 = vmatpush.msra.mxu0 %v1082
    %v1084 = vand.u32 %v45, 4294901760
    %v1085 = vsub.f32 %v45, %v1084
    %v1086 = vand.u32 %v1085, 4294901760
    %1087 = vmatpush.msra.mxu0 %v1086
    %v1088 = vand.u32 %v42, 4294901760
    %1089 = vmatmul.f32.gmra.mxu0 %v1088
    %v1090 = vpop.f32.mrf.mxu0
    %v1091 = vadd.f32 %v1022, %v1090
    %1092 = vdwg.mxu0
    %v1093 = vand.u32 %v105, 4294901760
    %1094 = vmatpush.msra.mxu0 %v1093
    %v1095 = vand.u32 %v101, 4294901760
    %1096 = vmatpush.msra.mxu0 %v1095
    %v1097 = vand.u32 %v97, 4294901760
    %1098 = vmatpush.msra.mxu0 %v1097
    %v1099 = vand.u32 %v93, 4294901760
    %1100 = vmatpush.msra.mxu0 %v1099
    %v1101 = vand.u32 %v89, 4294901760
    %1102 = vmatpush.msra.mxu0 %v1101
    %v1103 = vand.u32 %v85, 4294901760
    %1104 = vmatpush.msra.mxu0 %v1103
    %v1105 = vand.u32 %v81, 4294901760
    %1106 = vmatpush.msra.mxu0 %v1105
    %v1107 = vand.u32 %v77, 4294901760
    %1108 = vmatpush.msra.mxu0 %v1107
    %v1109 = vand.u32 %v73, 4294901760
    %1110 = vmatpush.msra.mxu0 %v1109
    %v1111 = vand.u32 %v69, 4294901760
    %1112 = vmatpush.msra.mxu0 %v1111
    %v1113 = vand.u32 %v65, 4294901760
    %1114 = vmatpush.msra.mxu0 %v1113
    %v1115 = vand.u32 %v61, 4294901760
    %1116 = vmatpush.msra.mxu0 %v1115
    %v1117 = vand.u32 %v57, 4294901760
    %1118 = vmatpush.msra.mxu0 %v1117
    %v1119 = vand.u32 %v53, 4294901760
    %1120 = vmatpush.msra.mxu0 %v1119
    %v1121 = vand.u32 %v49, 4294901760
    %1122 = vmatpush.msra.mxu0 %v1121
    %v1123 = vand.u32 %v45, 4294901760
    %1124 = vmatpush.msra.mxu0 %v1123
    %v1125 = vand.u32 %v42, 4294901760
    %1126 = vmatmul.f32.gmra.mxu0 %v1125
    %v1127 = vpop.f32.mrf.mxu0
    %v1128 = vadd.f32 %v1091, %v1127
    %1129 = vdwg.mxu0
    %v1130 = vand.u32 %v106, 4294901760
    %1131 = vmatpush.msra.mxu0 %v1130
    %v1132 = vand.u32 %v102, 4294901760
    %1133 = vmatpush.msra.mxu0 %v1132
    %v1134 = vand.u32 %v98, 4294901760
    %1135 = vmatpush.msra.mxu0 %v1134
    %v1136 = vand.u32 %v94, 4294901760
    %1137 = vmatpush.msra.mxu0 %v1136
    %v1138 = vand.u32 %v90, 4294901760
    %1139 = vmatpush.msra.mxu0 %v1138
    %v1140 = vand.u32 %v86, 4294901760
    %1141 = vmatpush.msra.mxu0 %v1140
    %v1142 = vand.u32 %v82, 4294901760
    %1143 = vmatpush.msra.mxu0 %v1142
    %v1144 = vand.u32 %v78, 4294901760
    %1145 = vmatpush.msra.mxu0 %v1144
    %v1146 = vand.u32 %v74, 4294901760
    %1147 = vmatpush.msra.mxu0 %v1146
    %v1148 = vand.u32 %v70, 4294901760
    %1149 = vmatpush.msra.mxu0 %v1148
    %v1150 = vand.u32 %v66, 4294901760
    %1151 = vmatpush.msra.mxu0 %v1150
    %v1152 = vand.u32 %v62, 4294901760
    %1153 = vmatpush.msra.mxu0 %v1152
    %v1154 = vand.u32 %v58, 4294901760
    %1155 = vmatpush.msra.mxu0 %v1154
    %v1156 = vand.u32 %v54, 4294901760
    %1157 = vmatpush.msra.mxu0 %v1156
    %v1158 = vand.u32 %v50, 4294901760
    %1159 = vmatpush.msra.mxu0 %v1158
    %v1160 = vand.u32 %v46, 4294901760
    %1161 = vmatpush.msra.mxu0 %v1160
    %v1162 = vand.u32 %v42, 4294901760
    %v1163 = vsub.f32 %v42, %v1162
    %v1164 = vand.u32 %v1163, 4294901760
    %v1165 = vsub.f32 %v1163, %v1164
    %v1166 = vand.u32 %v1165, 4294901760
    %1167 = vmatmul.f32.gmra.mxu0 %v1166
    %v1168 = vpop.f32.mrf.mxu0
    %v1169 = vadd.f32 0.0, %v1168
    %1170 = vdwg.mxu0
    %v1171 = vand.u32 %v106, 4294901760
    %v1172 = vsub.f32 %v106, %v1171
    %v1173 = vand.u32 %v1172, 4294901760
    %v1174 = vsub.f32 %v1172, %v1173
    %v1175 = vand.u32 %v1174, 4294901760
    %1176 = vmatpush.msra.mxu0 %v1175
    %v1177 = vand.u32 %v102, 4294901760
    %v1178 = vsub.f32 %v102, %v1177
    %v1179 = vand.u32 %v1178, 4294901760
    %v1180 = vsub.f32 %v1178, %v1179
    %v1181 = vand.u32 %v1180, 4294901760
    %1182 = vmatpush.msra.mxu0 %v1181
    %v1183 = vand.u32 %v98, 4294901760
    %v1184 = vsub.f32 %v98, %v1183
    %v1185 = vand.u32 %v1184, 4294901760
    %v1186 = vsub.f32 %v1184, %v1185
    %v1187 = vand.u32 %v1186, 4294901760
    %1188 = vmatpush.msra.mxu0 %v1187
    %v1189 = vand.u32 %v94, 4294901760
    %v1190 = vsub.f32 %v94, %v1189
    %v1191 = vand.u32 %v1190, 4294901760
    %v1192 = vsub.f32 %v1190, %v1191
    %v1193 = vand.u32 %v1192, 4294901760
    %1194 = vmatpush.msra.mxu0 %v1193
    %v1195 = vand.u32 %v90, 4294901760
    %v1196 = vsub.f32 %v90, %v1195
    %v1197 = vand.u32 %v1196, 4294901760
    %v1198 = vsub.f32 %v1196, %v1197
    %v1199 = vand.u32 %v1198, 4294901760
    %1200 = vmatpush.msra.mxu0 %v1199
    %v1201 = vand.u32 %v86, 4294901760
    %v1202 = vsub.f32 %v86, %v1201
    %v1203 = vand.u32 %v1202, 4294901760
    %v1204 = vsub.f32 %v1202, %v1203
    %v1205 = vand.u32 %v1204, 4294901760
    %1206 = vmatpush.msra.mxu0 %v1205
    %v1207 = vand.u32 %v82, 4294901760
    %v1208 = vsub.f32 %v82, %v1207
    %v1209 = vand.u32 %v1208, 4294901760
    %v1210 = vsub.f32 %v1208, %v1209
    %v1211 = vand.u32 %v1210, 4294901760
    %1212 = vmatpush.msra.mxu0 %v1211
    %v1213 = vand.u32 %v78, 4294901760
    %v1214 = vsub.f32 %v78, %v1213
    %v1215 = vand.u32 %v1214, 4294901760
    %v1216 = vsub.f32 %v1214, %v1215
    %v1217 = vand.u32 %v1216, 4294901760
    %1218 = vmatpush.msra.mxu0 %v1217
    %v1219 = vand.u32 %v74, 4294901760
    %v1220 = vsub.f32 %v74, %v1219
    %v1221 = vand.u32 %v1220, 4294901760
    %v1222 = vsub.f32 %v1220, %v1221
    %v1223 = vand.u32 %v1222, 4294901760
    %1224 = vmatpush.msra.mxu0 %v1223
    %v1225 = vand.u32 %v70, 4294901760
    %v1226 = vsub.f32 %v70, %v1225
    %v1227 = vand.u32 %v1226, 4294901760
    %v1228 = vsub.f32 %v1226, %v1227
    %v1229 = vand.u32 %v1228, 4294901760
    %1230 = vmatpush.msra.mxu0 %v1229
    %v1231 = vand.u32 %v66, 4294901760
    %v1232 = vsub.f32 %v66, %v1231
    %v1233 = vand.u32 %v1232, 4294901760
    %v1234 = vsub.f32 %v1232, %v1233
    %v1235 = vand.u32 %v1234, 4294901760
    %1236 = vmatpush.msra.mxu0 %v1235
    %v1237 = vand.u32 %v62, 4294901760
    %v1238 = vsub.f32 %v62, %v1237
    %v1239 = vand.u32 %v1238, 4294901760
    %v1240 = vsub.f32 %v1238, %v1239
    %v1241 = vand.u32 %v1240, 4294901760
    %1242 = vmatpush.msra.mxu0 %v1241
    %v1243 = vand.u32 %v58, 4294901760
    %v1244 = vsub.f32 %v58, %v1243
    %v1245 = vand.u32 %v1244, 4294901760
    %v1246 = vsub.f32 %v1244, %v1245
    %v1247 = vand.u32 %v1246, 4294901760
    %1248 = vmatpush.msra.mxu0 %v1247
    %v1249 = vand.u32 %v54, 4294901760
    %v1250 = vsub.f32 %v54, %v1249
    %v1251 = vand.u32 %v1250, 4294901760
    %v1252 = vsub.f32 %v1250, %v1251
    %v1253 = vand.u32 %v1252, 4294901760
    %1254 = vmatpush.msra.mxu0 %v1253
    %v1255 = vand.u32 %v50, 4294901760
    %v1256 = vsub.f32 %v50, %v1255
    %v1257 = vand.u32 %v1256, 4294901760
    %v1258 = vsub.f32 %v1256, %v1257
    %v1259 = vand.u32 %v1258, 4294901760
    %1260 = vmatpush.msra.mxu0 %v1259
    %v1261 = vand.u32 %v46, 4294901760
    %v1262 = vsub.f32 %v46, %v1261
    %v1263 = vand.u32 %v1262, 4294901760
    %v1264 = vsub.f32 %v1262, %v1263
    %v1265 = vand.u32 %v1264, 4294901760
    %1266 = vmatpush.msra.mxu0 %v1265
    %v1267 = vand.u32 %v42, 4294901760
    %1268 = vmatmul.f32.gmra.mxu0 %v1267
    %v1269 = vpop.f32.mrf.mxu0
    %v1270 = vadd.f32 %v1169, %v1269
    %1271 = vdwg.mxu0
    %v1272 = vand.u32 %v106, 4294901760
    %v1273 = vsub.f32 %v106, %v1272
    %1274 = vmatpush.msra.mxu0 %v1273
    %v1275 = vand.u32 %v102, 4294901760
    %v1276 = vsub.f32 %v102, %v1275
    %1277 = vmatpush.msra.mxu0 %v1276
    %v1278 = vand.u32 %v98, 4294901760
    %v1279 = vsub.f32 %v98, %v1278
    %1280 = vmatpush.msra.mxu0 %v1279
    %v1281 = vand.u32 %v94, 4294901760
    %v1282 = vsub.f32 %v94, %v1281
    %1283 = vmatpush.msra.mxu0 %v1282
    %v1284 = vand.u32 %v90, 4294901760
    %v1285 = vsub.f32 %v90, %v1284
    %1286 = vmatpush.msra.mxu0 %v1285
    %v1287 = vand.u32 %v86, 4294901760
    %v1288 = vsub.f32 %v86, %v1287
    %1289 = vmatpush.msra.mxu0 %v1288
    %v1290 = vand.u32 %v82, 4294901760
    %v1291 = vsub.f32 %v82, %v1290
    %1292 = vmatpush.msra.mxu0 %v1291
    %v1293 = vand.u32 %v78, 4294901760
    %v1294 = vsub.f32 %v78, %v1293
    %1295 = vmatpush.msra.mxu0 %v1294
    %v1296 = vand.u32 %v74, 4294901760
    %v1297 = vsub.f32 %v74, %v1296
    %1298 = vmatpush.msra.mxu0 %v1297
    %v1299 = vand.u32 %v70, 4294901760
    %v1300 = vsub.f32 %v70, %v1299
    %1301 = vmatpush.msra.mxu0 %v1300
    %v1302 = vand.u32 %v66, 4294901760
    %v1303 = vsub.f32 %v66, %v1302
    %1304 = vmatpush.msra.mxu0 %v1303
    %v1305 = vand.u32 %v62, 4294901760
    %v1306 = vsub.f32 %v62, %v1305
    %1307 = vmatpush.msra.mxu0 %v1306
    %v1308 = vand.u32 %v58, 4294901760
    %v1309 = vsub.f32 %v58, %v1308
    %1310 = vmatpush.msra.mxu0 %v1309
    %v1311 = vand.u32 %v54, 4294901760
    %v1312 = vsub.f32 %v54, %v1311
    %1313 = vmatpush.msra.mxu0 %v1312
    %v1314 = vand.u32 %v50, 4294901760
    %v1315 = vsub.f32 %v50, %v1314
    %1316 = vmatpush.msra.mxu0 %v1315
    %v1317 = vand.u32 %v46, 4294901760
    %v1318 = vsub.f32 %v46, %v1317
    %1319 = vmatpush.msra.mxu0 %v1318
    %v1320 = vand.u32 %v42, 4294901760
    %v1321 = vsub.f32 %v42, %v1320
    %1322 = vmatmul.f32.gmra.mxu0 %v1321
    %v1323 = vpop.f32.mrf.mxu0
    %v1324 = vadd.f32 %v1270, %v1323
    %1325 = vdwg.mxu0
    %v1326 = vand.u32 %v106, 4294901760
    %1327 = vmatpush.msra.mxu0 %v1326
    %v1328 = vand.u32 %v102, 4294901760
    %1329 = vmatpush.msra.mxu0 %v1328
    %v1330 = vand.u32 %v98, 4294901760
    %1331 = vmatpush.msra.mxu0 %v1330
    %v1332 = vand.u32 %v94, 4294901760
    %1333 = vmatpush.msra.mxu0 %v1332
    %v1334 = vand.u32 %v90, 4294901760
    %1335 = vmatpush.msra.mxu0 %v1334
    %v1336 = vand.u32 %v86, 4294901760
    %1337 = vmatpush.msra.mxu0 %v1336
    %v1338 = vand.u32 %v82, 4294901760
    %1339 = vmatpush.msra.mxu0 %v1338
    %v1340 = vand.u32 %v78, 4294901760
    %1341 = vmatpush.msra.mxu0 %v1340
    %v1342 = vand.u32 %v74, 4294901760
    %1343 = vmatpush.msra.mxu0 %v1342
    %v1344 = vand.u32 %v70, 4294901760
    %1345 = vmatpush.msra.mxu0 %v1344
    %v1346 = vand.u32 %v66, 4294901760
    %1347 = vmatpush.msra.mxu0 %v1346
    %v1348 = vand.u32 %v62, 4294901760
    %1349 = vmatpush.msra.mxu0 %v1348
    %v1350 = vand.u32 %v58, 4294901760
    %1351 = vmatpush.msra.mxu0 %v1350
    %v1352 = vand.u32 %v54, 4294901760
    %1353 = vmatpush.msra.mxu0 %v1352
    %v1354 = vand.u32 %v50, 4294901760
    %1355 = vmatpush.msra.mxu0 %v1354
    %v1356 = vand.u32 %v46, 4294901760
    %1357 = vmatpush.msra.mxu0 %v1356
    %v1358 = vand.u32 %v42, 4294901760
    %v1359 = vsub.f32 %v42, %v1358
    %v1360 = vand.u32 %v1359, 4294901760
    %1361 = vmatmul.f32.gmra.mxu0 %v1360
    %v1362 = vpop.f32.mrf.mxu0
    %v1363 = vadd.f32 %v1324, %v1362
    %1364 = vdwg.mxu0
    %v1365 = vand.u32 %v106, 4294901760
    %v1366 = vsub.f32 %v106, %v1365
    %v1367 = vand.u32 %v1366, 4294901760
    %1368 = vmatpush.msra.mxu0 %v1367
    %v1369 = vand.u32 %v102, 4294901760
    %v1370 = vsub.f32 %v102, %v1369
    %v1371 = vand.u32 %v1370, 4294901760
    %1372 = vmatpush.msra.mxu0 %v1371
    %v1373 = vand.u32 %v98, 4294901760
    %v1374 = vsub.f32 %v98, %v1373
    %v1375 = vand.u32 %v1374, 4294901760
    %1376 = vmatpush.msra.mxu0 %v1375
    %v1377 = vand.u32 %v94, 4294901760
    %v1378 = vsub.f32 %v94, %v1377
    %v1379 = vand.u32 %v1378, 4294901760
    %1380 = vmatpush.msra.mxu0 %v1379
    %v1381 = vand.u32 %v90, 4294901760
    %v1382 = vsub.f32 %v90, %v1381
    %v1383 = vand.u32 %v1382, 4294901760
    %1384 = vmatpush.msra.mxu0 %v1383
    %v1385 = vand.u32 %v86, 4294901760
    %v1386 = vsub.f32 %v86, %v1385
    %v1387 = vand.u32 %v1386, 4294901760
    %1388 = vmatpush.msra.mxu0 %v1387
    %v1389 = vand.u32 %v82, 4294901760
    %v1390 = vsub.f32 %v82, %v1389
    %v1391 = vand.u32 %v1390, 4294901760
    %1392 = vmatpush.msra.mxu0 %v1391
    %v1393 = vand.u32 %v78, 4294901760
    %v1394 = vsub.f32 %v78, %v1393
    %v1395 = vand.u32 %v1394, 4294901760
    %1396 = vmatpush.msra.mxu0 %v1395
    %v1397 = vand.u32 %v74, 4294901760
    %v1398 = vsub.f32 %v74, %v1397
    %v1399 = vand.u32 %v1398, 4294901760
    %1400 = vmatpush.msra.mxu0 %v1399
    %v1401 = vand.u32 %v70, 4294901760
    %v1402 = vsub.f32 %v70, %v1401
    %v1403 = vand.u32 %v1402, 4294901760
    %1404 = vmatpush.msra.mxu0 %v1403
    %v1405 = vand.u32 %v66, 4294901760
    %v1406 = vsub.f32 %v66, %v1405
    %v1407 = vand.u32 %v1406, 4294901760
    %1408 = vmatpush.msra.mxu0 %v1407
    %v1409 = vand.u32 %v62, 4294901760
    %v1410 = vsub.f32 %v62, %v1409
    %v1411 = vand.u32 %v1410, 4294901760
    %1412 = vmatpush.msra.mxu0 %v1411
    %v1413 = vand.u32 %v58, 4294901760
    %v1414 = vsub.f32 %v58, %v1413
    %v1415 = vand.u32 %v1414, 4294901760
    %1416 = vmatpush.msra.mxu0 %v1415
    %v1417 = vand.u32 %v54, 4294901760
    %v1418 = vsub.f32 %v54, %v1417
    %v1419 = vand.u32 %v1418, 4294901760
    %1420 = vmatpush.msra.mxu0 %v1419
    %v1421 = vand.u32 %v50, 4294901760
    %v1422 = vsub.f32 %v50, %v1421
    %v1423 = vand.u32 %v1422, 4294901760
    %1424 = vmatpush.msra.mxu0 %v1423
    %v1425 = vand.u32 %v46, 4294901760
    %v1426 = vsub.f32 %v46, %v1425
    %v1427 = vand.u32 %v1426, 4294901760
    %1428 = vmatpush.msra.mxu0 %v1427
    %v1429 = vand.u32 %v42, 4294901760
    %1430 = vmatmul.f32.gmra.mxu0 %v1429
    %v1431 = vpop.f32.mrf.mxu0
    %v1432 = vadd.f32 %v1363, %v1431
    %1433 = vdwg.mxu0
    %v1434 = vand.u32 %v106, 4294901760
    %1435 = vmatpush.msra.mxu0 %v1434
    %v1436 = vand.u32 %v102, 4294901760
    %1437 = vmatpush.msra.mxu0 %v1436
    %v1438 = vand.u32 %v98, 4294901760
    %1439 = vmatpush.msra.mxu0 %v1438
    %v1440 = vand.u32 %v94, 4294901760
    %1441 = vmatpush.msra.mxu0 %v1440
    %v1442 = vand.u32 %v90, 4294901760
    %1443 = vmatpush.msra.mxu0 %v1442
    %v1444 = vand.u32 %v86, 4294901760
    %1445 = vmatpush.msra.mxu0 %v1444
    %v1446 = vand.u32 %v82, 4294901760
    %1447 = vmatpush.msra.mxu0 %v1446
    %v1448 = vand.u32 %v78, 4294901760
    %1449 = vmatpush.msra.mxu0 %v1448
    %v1450 = vand.u32 %v74, 4294901760
    %1451 = vmatpush.msra.mxu0 %v1450
    %v1452 = vand.u32 %v70, 4294901760
    %1453 = vmatpush.msra.mxu0 %v1452
    %v1454 = vand.u32 %v66, 4294901760
    %1455 = vmatpush.msra.mxu0 %v1454
    %v1456 = vand.u32 %v62, 4294901760
    %1457 = vmatpush.msra.mxu0 %v1456
    %v1458 = vand.u32 %v58, 4294901760
    %1459 = vmatpush.msra.mxu0 %v1458
    %v1460 = vand.u32 %v54, 4294901760
    %1461 = vmatpush.msra.mxu0 %v1460
    %v1462 = vand.u32 %v50, 4294901760
    %1463 = vmatpush.msra.mxu0 %v1462
    %v1464 = vand.u32 %v46, 4294901760
    %1465 = vmatpush.msra.mxu0 %v1464
    %v1466 = vand.u32 %v42, 4294901760
    %1467 = vmatmul.f32.gmra.mxu0 %v1466
    %v1468 = vpop.f32.mrf.mxu0
    %v1469 = vadd.f32 %v1432, %v1468
    %1470 = vdwg.mxu0
    %v1475 = vrot.slane %v787, 7
    %v1476 = vrot.slane %v1128, 6
    %v1477 = vrot.slane %v1469, 5
    %vm1478 = vcmask 1040384
    %v1479 = vsel %vm1478, %v446, %v1475
    %vm1480 = vcmask 1042434
    %v1481 = vsel %vm1480, %v1476, %v1477
    %vm1482 = vcmask 1041408
    %v1483 = vsel %vm1482, %v1479, %v1481
    %v1485 = vlaneseq
    %vm1486 = vcmp.ge.s32.totalorder %v1485, 0
    %vm1487 = vcmp.lt.s32.totalorder %v1485, 512
    %vm1488 = vmand %vm1486, %vm1487
    %1489 = vst.msk [vmem:[#allocation7] sm:$0xf] %vm1488, %v1483
    // Predicated region
    $region18: #{tpu_custom_call.1} parent=1 // pred_check
      _
    $region19: #{tpu_custom_call.1} parent=1 // pred_check_branch
      %1491 = sbr.rel (0) target = $region21
    $region20: #{tpu_custom_call.1} parent=1 // pred_region
      %1493 = vsyncadd [#allocation4], 0
      %s1495 = sshll.u32 [#allocation7], 4
      %s1496 = int_to_ptr.vmem [resolvable:$true] %s1495
      %s1497 = sshll.u32 %s2, 4
      %s1498 = int_to_ptr.hbm [resolvable:$true] %s1497
      %1500 = dma.vmem_to_hbm [thread:$0]  %s1496, 64, %s1498, [#allocation4]
    $region21: #{tpu_custom_call.1} parent=1 // pred_fallthru
      _
    // Predicated region
    $region22: #{tpu_custom_call.1} parent=1 // pred_check
      _
    $region23: #{tpu_custom_call.1} parent=1 // pred_check_branch
      %1502 = sbr.rel (0) target = $region25
    $region24: #{tpu_custom_call.1} parent=1 // pred_region
      %1504 = dma.done [#allocation4], 64
    $region25: #{tpu_custom_call.1} parent=1 // pred_fallthru
      _
    %1505 = vsyncpa [#allocation3], 1
    %1506 = vsyncpa [#allocation6], 1
    %1507 = vsyncpa [#allocation4], 1

</llo_original>
